<compile_context>
chip_gen: v5e
topology: v5e:2x2
jax: 0.10.0
libtpu: 0.0.40
codegen_flags: <defaults>
</compile_context>

<pallas_src>
import functools

import jax
import jax.numpy as jnp
from jax.experimental import pallas as pl
from jax.experimental.pallas import tpu as pltpu


def _spconv_kernel(x_ref, w_ref, o_ref, *, kh, kw, width):
    # x_ref: (Cp, B*H*W)      channels (+ ones/zero pad rows) on sublanes,
    #                          batch*spatial flattened onto lanes
    # w_ref: (Co, KH*KW*Cp)   im2col weight, bias folded into the ones-row col
    # o_ref: (Co, B*H*W)      lane-dense output (Co = out_channels * r)
    x = x_ref[...]
    n = x.shape[1]

    # Build the im2col patch in registers: KH*KW statically-rolled views of x
    # (XLU lane rotations), each an aligned 8-sublane chunk, concatenated along
    # the contraction axis.  Wrapped / cross-batch columns only pollute output
    # positions with h >= Ho or w >= Wo, which the wrapper slices away.
    taps = []
    for i in range(kh):
        for j in range(kw):
            delta = i * width + j
            taps.append(x if delta == 0 else pltpu.roll(x, shift=n - delta, axis=1))
    patch = jnp.concatenate(taps, axis=0)          # (KH*KW*Cp, B*H*W)

    # Single fused MXU matmul: conv + bias in one pass.
    o_ref[...] = jnp.dot(w_ref[...], patch,
                         preferred_element_type=jnp.float32).astype(o_ref.dtype)


def prepare_params(weight, bias, cp):
    """One-time prep: fold Conv2d weight + bias into a (Co, KH*KW*Cp) matrix.

    Channel axis is zero-padded Cin -> Cp; the column at channel index Cin of
    tap (0, 0) carries the bias (it multiplies the constant-ones row that the
    input packing appends), so bias is applied exactly once inside the matmul.
    """
    Co, Cin, KH, KW = weight.shape
    w_t = jnp.transpose(weight, (2, 3, 1, 0))                   # (KH, KW, Cin, Co)
    w_pad = jnp.zeros((KH, KW, cp, Co), weight.dtype)
    w_pad = w_pad.at[:, :, :Cin, :].set(w_t)
    w_pad = w_pad.at[0, 0, Cin, :].set(bias)
    return w_pad.reshape(KH * KW * cp, Co).T                    # (Co, KH*KW*Cp)


@functools.partial(jax.jit, static_argnames=("kh", "kw", "r"))
def spconv_transpose2d(x_nchw, w2, *, kh, kw, r):
    """x_nchw: (B, Cin, H, W); w2: (Cout*r, KH*KW*Cp) from prepare_params."""
    B, Cin, H, W = x_nchw.shape
    Co = w2.shape[0]
    Cout = Co // r
    Cp = w2.shape[1] // (kh * kw)
    Ho, Wo = H - kh + 1, W - kw + 1
    BHW = B * H * W

    # Pack input: (Cin, B*HW) with a constant-ones row (bias) and zero rows
    # padding the channel axis up to Cp (tile-aligned taps in the kernel).
    x_t = jnp.transpose(x_nchw, (1, 0, 2, 3)).reshape(Cin, BHW)
    bias_row = jnp.ones((1, BHW), x_t.dtype)
    zero_rows = jnp.zeros((Cp - Cin - 1, BHW), x_t.dtype)
    x_pad = jnp.concatenate([x_t, bias_row, zero_rows], axis=0)  # (Cp, BHW)

    y = pl.pallas_call(
        functools.partial(_spconv_kernel, kh=kh, kw=kw, width=W),
        out_shape=jax.ShapeDtypeStruct((Co, BHW), x_nchw.dtype),
        in_specs=[
            pl.BlockSpec(memory_space=pltpu.MemorySpace.VMEM),
            pl.BlockSpec(memory_space=pltpu.MemorySpace.VMEM),
        ],
        out_specs=pl.BlockSpec(memory_space=pltpu.MemorySpace.VMEM),
    )(x_pad, w2)

    # y[s*Cout + c, b*HW + h*W + w] = conv[b, s*Cout + c, h, w] + bias
    # (valid for h < Ho, w < Wo; wrapped / cross-batch columns are dropped).
    y = y.reshape(r, Cout, B, H, W)[:, :, :, :Ho, :Wo]          # (r, Cout, B, Ho, Wo)
    out = jnp.transpose(y, (2, 1, 3, 4, 0)).reshape(B, Cout, Ho, Wo * r)
    return out


def _reference(x_nchw, weight, bias, r):
    """Pure-JAX reference mirroring the PyTorch forward."""
    conv = jax.lax.conv_general_dilated(
        x_nchw, weight, window_strides=(1, 1), padding="VALID",
        dimension_numbers=("NCHW", "OIHW", "NCHW"))
    conv = conv + bias[None, :, None, None]
    B, nch, H, W = conv.shape
    out = conv.reshape(B, r, nch // r, H, W)
    out = jnp.transpose(out, (0, 2, 3, 4, 1))
    return out.reshape(B, nch // r, H, W * r)


if __name__ == "__main__":
    # Module config (small, consistent with SPConvTranspose2d.__init__).
    in_channels, out_channels, kernel_size, r = 4, 4, 3, 2
    B, H, W = 2, 16, 16

    key = jax.random.PRNGKey(0)
    kx, kw_, kb = jax.random.split(key, 3)

    x = jax.random.normal(kx, (B, in_channels, H, W), dtype=jnp.float32)

    # Deterministic Conv2d-style init: U(-1/sqrt(fan_in), 1/sqrt(fan_in)).
    fan_in = in_channels * kernel_size * kernel_size
    bound = 1.0 / (fan_in ** 0.5)
    weight = jax.random.uniform(
        kw_, (out_channels * r, in_channels, kernel_size, kernel_size),
        minval=-bound, maxval=bound, dtype=jnp.float32)
    bias = jax.random.uniform(
        kb, (out_channels * r,), minval=-bound, maxval=bound, dtype=jnp.float32)

    # One-time im2col weight/bias prep, hoisted out of the per-call path.
    Cp = ((in_channels + 1 + 7) // 8) * 8      # padded channel count (>= Cin+1)
    w2 = prepare_params(weight, bias, Cp)      # (Cout*r, KH*KW*Cp)

    y = spconv_transpose2d(x, w2, kh=kernel_size, kw=kernel_size, r=r)
    y = jax.block_until_ready(y)

    y_ref = _reference(x, weight, bias, r)
    assert y.shape == (B, out_channels, H - kernel_size + 1,
                       (W - kernel_size + 1) * r), y.shape
    assert jnp.allclose(y, y_ref, atol=1e-4, rtol=1e-4), "mismatch vs reference"

    print("KERNEL_OK")
</pallas_src>

<mosaic_0001>
module attributes {stable_mosaic.version = 11 : i64} {
  func.func @_spconv_kernel(%arg0: memref<8x512xf32, #tpu.memory_space<vmem>>, %arg1: memref<8x72xf32, #tpu.memory_space<vmem>>, %arg2: memref<8x512xf32, #tpu.memory_space<vmem>>) attributes {dimension_semantics = [], scalar_prefetch = 0 : i64, scratch_operands = 0 : i64, tpu.core_type = #tpu.core_type<tc>} {
    %c0 = arith.constant 0 : index
    %c0_0 = arith.constant 0 : index
    %0 = vector.load %arg0[%c0, %c0_0] : memref<8x512xf32, #tpu.memory_space<vmem>>, vector<8x512xf32>
    %c511_i32 = arith.constant 511 : i32
    %1 = tpu.dynamic_rotate %0 by %c511_i32 dim 1 : vector<8x512xf32>, i32 -> vector<8x512xf32>
    %c510_i32 = arith.constant 510 : i32
    %2 = tpu.dynamic_rotate %0 by %c510_i32 dim 1 : vector<8x512xf32>, i32 -> vector<8x512xf32>
    %c496_i32 = arith.constant 496 : i32
    %3 = tpu.dynamic_rotate %0 by %c496_i32 dim 1 : vector<8x512xf32>, i32 -> vector<8x512xf32>
    %c495_i32 = arith.constant 495 : i32
    %4 = tpu.dynamic_rotate %0 by %c495_i32 dim 1 : vector<8x512xf32>, i32 -> vector<8x512xf32>
    %c494_i32 = arith.constant 494 : i32
    %5 = tpu.dynamic_rotate %0 by %c494_i32 dim 1 : vector<8x512xf32>, i32 -> vector<8x512xf32>
    %c480_i32 = arith.constant 480 : i32
    %6 = tpu.dynamic_rotate %0 by %c480_i32 dim 1 : vector<8x512xf32>, i32 -> vector<8x512xf32>
    %c479_i32 = arith.constant 479 : i32
    %7 = tpu.dynamic_rotate %0 by %c479_i32 dim 1 : vector<8x512xf32>, i32 -> vector<8x512xf32>
    %c478_i32 = arith.constant 478 : i32
    %8 = tpu.dynamic_rotate %0 by %c478_i32 dim 1 : vector<8x512xf32>, i32 -> vector<8x512xf32>
    %9 = tpu.concatenate %0, %1, %2, %3, %4, %5, %6, %7, %8 in 0 : vector<8x512xf32>, vector<8x512xf32>, vector<8x512xf32>, vector<8x512xf32>, vector<8x512xf32>, vector<8x512xf32>, vector<8x512xf32>, vector<8x512xf32>, vector<8x512xf32> -> vector<72x512xf32>
    %c0_1 = arith.constant 0 : index
    %c0_2 = arith.constant 0 : index
    %10 = vector.load %arg1[%c0_1, %c0_2] : memref<8x72xf32, #tpu.memory_space<vmem>>, vector<8x72xf32>
    %cst = arith.constant dense<0.000000e+00> : vector<8x512xf32>
    %11 = tpu.matmul %10, %9, %cst {dimension_numbers = #tpu.dot_dimension_numbers<[1], [0], [0], [1], [0, 0, 1, 1], [], []>} : vector<8x72xf32>, vector<72x512xf32>, vector<8x512xf32> -> vector<8x512xf32>
    %c0_3 = arith.constant 0 : index
    %c0_4 = arith.constant 0 : index
    %12 = vector.load %arg2[%c0_3, %c0_4] : memref<8x512xf32, #tpu.memory_space<vmem>>, vector<8x512xf32>
    tpu.vector_store %arg2[%c0_3, %c0_4], %11 {strides = array<i32>} : memref<8x512xf32, #tpu.memory_space<vmem>>, vector<8x512xf32>,
    return
  }
}

</mosaic_0001>

<llo_original>
// kernel: spconv_transpose2d.1
$region0: #{spconv_transpose2d.1}
  #allocation0 [shape = 'u32[]', space=smem, size = 0x4, offset = 0x4, fixed_abs, tag = 'smem constant byte address 0x4 - core index']
  #allocation1 [shape = 'u32[72,128]{1,0:T(1,128)}', space=vmem, size = 0x9000, scoped, tag = 'internal scratch']
  %s0 = inlined_call_operand.vmem [shape: f32[8,512], index: 0, kind: input, shape index: {}]
  %s1 = inlined_call_operand.vmem [shape: f32[8,72], index: 1, kind: input, shape index: {}]
  %s2 = inlined_call_operand.vmem [shape: f32[8,512], index: 2, kind: output, shape index: {}]
  %s3 = sld [smem:[#allocation0]]
  $region18: #{spconv_transpose2d.1} parent=0
    _
  %s5 = ssub.s32 1, %s3
  %s6 = scalar_select 0, %s5, %s3
  // Predicated region
  $region2: #{spconv_transpose2d.1} parent=0 // pred_check
    _
  $region3: #{spconv_transpose2d.1} parent=0 // pred_check_branch
    %8 = sbr.rel (0) target = $region5
  $region4: #{spconv_transpose2d.1} parent=0 // pred_region
    _
  $region5: #{spconv_transpose2d.1} parent=0 // pred_fallthru
    _
  // Predicated region
  $region6: #{spconv_transpose2d.1} parent=0 // pred_check
    _
  $region7: #{spconv_transpose2d.1} parent=0 // pred_check_branch
    %10 = sbr.rel (0) target = $region9
  $region8: #{spconv_transpose2d.1} parent=0 // pred_region
    _
  $region9: #{spconv_transpose2d.1} parent=0 // pred_fallthru
    _
  %v11 = vld [vmem:[%s0] sm:$0xff]
  %v12 = vld [vmem:[%s0 + $0x8] sm:$0xff]
  %v13 = vld [vmem:[%s0 + $0x10] sm:$0xff]
  %v14 = vld [vmem:[%s0 + $0x18] sm:$0xff]
  %15 = vrot.lane.b32.xlu0 %v11, 127
  %v16 = vpop.permute.xlu0 %15
  %17 = vrot.lane.b32.xlu0 %v12, 127
  %v18 = vpop.permute.xlu0 %17
  %19 = vrot.lane.b32.xlu0 %v13, 127
  %v20 = vpop.permute.xlu0 %19
  %21 = vrot.lane.b32.xlu0 %v14, 127
  %v22 = vpop.permute.xlu0 %21
  %v23 = vlaneseq
  %v24 = vand.u32 %v23, 127
  %vm25 = vcmp.lt.s32.totalorder %v24, 127
  %v26 = vsel %vm25, %v20, %v22
  %v27 = vsel %vm25, %v18, %v20
  %v28 = vsel %vm25, %v16, %v18
  %v29 = vsel %vm25, %v22, %v16
  %30 = vrot.lane.b32.xlu0 %v11, 126
  %v31 = vpop.permute.xlu0 %30
  %32 = vrot.lane.b32.xlu0 %v12, 126
  %v33 = vpop.permute.xlu0 %32
  %34 = vrot.lane.b32.xlu0 %v13, 126
  %v35 = vpop.permute.xlu0 %34
  %36 = vrot.lane.b32.xlu0 %v14, 126
  %v37 = vpop.permute.xlu0 %36
  %vm38 = vcmp.lt.s32.totalorder %v24, 126
  %v39 = vsel %vm38, %v35, %v37
  %v40 = vsel %vm38, %v33, %v35
  %v41 = vsel %vm38, %v31, %v33
  %v42 = vsel %vm38, %v37, %v31
  %43 = vrot.lane.b32.xlu0 %v11, 112
  %v44 = vpop.permute.xlu0 %43
  %45 = vrot.lane.b32.xlu0 %v12, 112
  %v46 = vpop.permute.xlu0 %45
  %47 = vrot.lane.b32.xlu0 %v13, 112
  %v48 = vpop.permute.xlu0 %47
  %49 = vrot.lane.b32.xlu0 %v14, 112
  %v50 = vpop.permute.xlu0 %49
  %vm51 = vcmp.lt.s32.totalorder %v24, 112
  %v52 = vsel %vm51, %v48, %v50
  %v53 = vsel %vm51, %v46, %v48
  %v54 = vsel %vm51, %v44, %v46
  %v55 = vsel %vm51, %v50, %v44
  %56 = vrot.lane.b32.xlu0 %v11, 111
  %v57 = vpop.permute.xlu0 %56
  %58 = vrot.lane.b32.xlu0 %v12, 111
  %v59 = vpop.permute.xlu0 %58
  %60 = vrot.lane.b32.xlu0 %v13, 111
  %v61 = vpop.permute.xlu0 %60
  %62 = vrot.lane.b32.xlu0 %v14, 111
  %v63 = vpop.permute.xlu0 %62
  %vm64 = vcmp.lt.s32.totalorder %v24, 111
  %v65 = vsel %vm64, %v61, %v63
  %v66 = vsel %vm64, %v59, %v61
  %v67 = vsel %vm64, %v57, %v59
  %v68 = vsel %vm64, %v63, %v57
  %69 = vrot.lane.b32.xlu0 %v11, 110
  %v70 = vpop.permute.xlu0 %69
  %71 = vrot.lane.b32.xlu0 %v12, 110
  %v72 = vpop.permute.xlu0 %71
  %73 = vrot.lane.b32.xlu0 %v13, 110
  %v74 = vpop.permute.xlu0 %73
  %75 = vrot.lane.b32.xlu0 %v14, 110
  %v76 = vpop.permute.xlu0 %75
  %vm77 = vcmp.lt.s32.totalorder %v24, 110
  %v78 = vsel %vm77, %v74, %v76
  %v79 = vsel %vm77, %v72, %v74
  %v80 = vsel %vm77, %v70, %v72
  %v81 = vsel %vm77, %v76, %v70
  %82 = vrot.lane.b32.xlu0 %v11, 96
  %v83 = vpop.permute.xlu0 %82
  %84 = vrot.lane.b32.xlu0 %v12, 96
  %v85 = vpop.permute.xlu0 %84
  %86 = vrot.lane.b32.xlu0 %v13, 96
  %v87 = vpop.permute.xlu0 %86
  %88 = vrot.lane.b32.xlu0 %v14, 96
  %v89 = vpop.permute.xlu0 %88
  %vm90 = vcmp.lt.s32.totalorder %v24, 96
  %v91 = vsel %vm90, %v87, %v89
  %v92 = vsel %vm90, %v85, %v87
  %v93 = vsel %vm90, %v83, %v85
  %v94 = vsel %vm90, %v89, %v83
  %95 = vrot.lane.b32.xlu0 %v11, 95
  %v96 = vpop.permute.xlu0 %95
  %97 = vrot.lane.b32.xlu0 %v12, 95
  %v98 = vpop.permute.xlu0 %97
  %99 = vrot.lane.b32.xlu0 %v13, 95
  %v100 = vpop.permute.xlu0 %99
  %101 = vrot.lane.b32.xlu0 %v14, 95
  %v102 = vpop.permute.xlu0 %101
  %vm103 = vcmp.lt.s32.totalorder %v24, 95
  %v104 = vsel %vm103, %v100, %v102
  %v105 = vsel %vm103, %v98, %v100
  %v106 = vsel %vm103, %v96, %v98
  %v107 = vsel %vm103, %v102, %v96
  %108 = vrot.lane.b32.xlu0 %v11, 94
  %v109 = vpop.permute.xlu0 %108
  %110 = vrot.lane.b32.xlu0 %v12, 94
  %v111 = vpop.permute.xlu0 %110
  %112 = vrot.lane.b32.xlu0 %v13, 94
  %v113 = vpop.permute.xlu0 %112
  %114 = vrot.lane.b32.xlu0 %v14, 94
  %v115 = vpop.permute.xlu0 %114
  %vm116 = vcmp.lt.s32.totalorder %v24, 94
  %v117 = vsel %vm116, %v113, %v115
  %v118 = vsel %vm116, %v111, %v113
  %v119 = vsel %vm116, %v109, %v111
  %v120 = vsel %vm116, %v115, %v109
  %v121 = vld [vmem:[%s1] sm:$0xff]
  %vm122 = vcmask 588800
  %v124 = vsel %vm122, %v121, 0
  %126 = vmatpush.msra.mxu0 0.0
  %127 = vmatpush.msra.mxu0 0.0
  %128 = vmatpush.msra.mxu0 0.0
  %129 = vmatpush.msra.mxu0 0.0
  %130 = vmatpush.msra.mxu0 0.0
  %131 = vmatpush.msra.mxu0 0.0
  %132 = vmatpush.msra.mxu0 0.0
  %133 = vmatpush.msra.mxu0 %v119
  %134 = vmatpush.msra.mxu0 %v106
  %135 = vmatpush.msra.mxu0 %v93
  %136 = vmatpush.msra.mxu0 %v80
  %137 = vmatpush.msra.mxu0 %v67
  %138 = vmatpush.msra.mxu0 %v54
  %139 = vmatpush.msra.mxu0 %v41
  %140 = vmatpush.msra.mxu0 %v28
  %141 = vmatpush.msra.mxu0 %v11
  %142 = vmatmul.f32.gmra.mxu0 %v124
  %v143 = vpop.f32.mrf.mxu0
  %v144 = vadd.f32 0.0, %v143
  %145 = vdwg.mxu0
  %146 = vmatpush.msra.mxu0 0.0
  %147 = vmatpush.msra.mxu0 0.0
  %148 = vmatpush.msra.mxu0 0.0
  %149 = vmatpush.msra.mxu0 0.0
  %150 = vmatpush.msra.mxu0 0.0
  %151 = vmatpush.msra.mxu0 0.0
  %152 = vmatpush.msra.mxu0 0.0
  %153 = vmatpush.msra.mxu0 %v118
  %154 = vmatpush.msra.mxu0 %v105
  %155 = vmatpush.msra.mxu0 %v92
  %156 = vmatpush.msra.mxu0 %v79
  %157 = vmatpush.msra.mxu0 %v66
  %158 = vmatpush.msra.mxu0 %v53
  %159 = vmatpush.msra.mxu0 %v40
  %160 = vmatpush.msra.mxu0 %v27
  %161 = vmatpush.msra.mxu0 %v12
  %162 = vmatmul.f32.gmra.mxu0 %v124
  %v163 = vpop.f32.mrf.mxu0
  %v164 = vadd.f32 0.0, %v163
  %165 = vdwg.mxu0
  %166 = vmatpush.msra.mxu0 0.0
  %167 = vmatpush.msra.mxu0 0.0
  %168 = vmatpush.msra.mxu0 0.0
  %169 = vmatpush.msra.mxu0 0.0
  %170 = vmatpush.msra.mxu0 0.0
  %171 = vmatpush.msra.mxu0 0.0
  %172 = vmatpush.msra.mxu0 0.0
  %173 = vmatpush.msra.mxu0 %v117
  %174 = vmatpush.msra.mxu0 %v104
  %175 = vmatpush.msra.mxu0 %v91
  %176 = vmatpush.msra.mxu0 %v78
  %177 = vmatpush.msra.mxu0 %v65
  %178 = vmatpush.msra.mxu0 %v52
  %179 = vmatpush.msra.mxu0 %v39
  %180 = vmatpush.msra.mxu0 %v26
  %181 = vmatpush.msra.mxu0 %v13
  %182 = vmatmul.f32.gmra.mxu0 %v124
  %v183 = vpop.f32.mrf.mxu0
  %v184 = vadd.f32 0.0, %v183
  %185 = vdwg.mxu0
  %186 = vmatpush.msra.mxu0 0.0
  %187 = vmatpush.msra.mxu0 0.0
  %188 = vmatpush.msra.mxu0 0.0
  %189 = vmatpush.msra.mxu0 0.0
  %190 = vmatpush.msra.mxu0 0.0
  %191 = vmatpush.msra.mxu0 0.0
  %192 = vmatpush.msra.mxu0 0.0
  %193 = vmatpush.msra.mxu0 %v120
  %194 = vmatpush.msra.mxu0 %v107
  %195 = vmatpush.msra.mxu0 %v94
  %196 = vmatpush.msra.mxu0 %v81
  %197 = vmatpush.msra.mxu0 %v68
  %198 = vmatpush.msra.mxu0 %v55
  %199 = vmatpush.msra.mxu0 %v42
  %200 = vmatpush.msra.mxu0 %v29
  %201 = vmatpush.msra.mxu0 %v14
  %202 = vmatmul.f32.gmra.mxu0 %v124
  %v203 = vpop.f32.mrf.mxu0
  %v204 = vadd.f32 0.0, %v203
  %205 = vdwg.mxu0
  %206 = vst [vmem:[%s2] sm:$0xff] %v144
  %207 = vst [vmem:[%s2 + $0x8] sm:$0xff] %v164
  %208 = vst [vmem:[%s2 + $0x10] sm:$0xff] %v184
  %209 = vst [vmem:[%s2 + $0x18] sm:$0xff] %v204
  // Predicated region
  $region10: #{spconv_transpose2d.1} parent=0 // pred_check
    _
  $region11: #{spconv_transpose2d.1} parent=0 // pred_check_branch
    %211 = sbr.rel (0) target = $region13
  $region12: #{spconv_transpose2d.1} parent=0 // pred_region
    _
  $region13: #{spconv_transpose2d.1} parent=0 // pred_fallthru
    _
  // Predicated region
  $region14: #{spconv_transpose2d.1} parent=0 // pred_check
    _
  $region15: #{spconv_transpose2d.1} parent=0 // pred_check_branch
    %213 = sbr.rel (0) target = $region17
  $region16: #{spconv_transpose2d.1} parent=0 // pred_region
    _
  $region17: #{spconv_transpose2d.1} parent=0 // pred_fallthru
    _

</llo_original>
